<compile_context>
chip_gen: v7x
topology: tpu7x:2x2x1
jax: 0.10.0
libtpu: 0.0.40
codegen_flags: <defaults>
</compile_context>

<pallas_src>
import jax
import jax.numpy as jnp
from jax.experimental import pallas as pl
from jax.experimental.pallas import tpu as pltpu


def linear_add_kernel(x_ref, p_ref, other_ref, out_ref):
    # x:      [tile_n, in_f]
    # p:      [in_f + 1, out_f]   rows 0..in_f-1 = weight.T, row in_f = bias
    # other:  [tile_n, out_f]
    # out:    [tile_n, out_f]
    in_f = p_ref.shape[0] - 1
    x = x_ref[...]
    w = p_ref[:in_f, :]          # static slice of the packed params
    b = p_ref[in_f:, :]          # [1, out_f] bias row (broadcasts over rows)
    # MXU matmul with exact f32 accumulation; bias + residual fused on the VPU.
    y = jnp.dot(x, w,
                preferred_element_type=jnp.float32,
                precision=jax.lax.Precision.HIGHEST)
    out_ref[...] = (y + b + other_ref[...]).astype(out_ref.dtype)


def linear_add(x, params, other, *, tile_n=1024):
    """out = x @ params[:in_f] + params[in_f] + other.

    params : [in_f + 1, out_f]  (pre-transposed Linear weight with the bias
                                  appended as the last row — packed once at
                                  init time, not per call)
    """
    N, in_f = x.shape
    out_f = other.shape[1]

    # Small call-sites (like the spec's N=3) run as a single full-array block;
    # batched call-sites get an N-grid with tile_n rows per step.
    padded_n = N
    if N <= tile_n:
        tile_n = N
    else:
        pad = (-N) % tile_n
        if pad:
            x = jnp.pad(x, ((0, pad), (0, 0)))
            other = jnp.pad(other, ((0, pad), (0, 0)))
            padded_n = N + pad
    grid = (padded_n // tile_n,)

    out = pl.pallas_call(
        linear_add_kernel,
        out_shape=jax.ShapeDtypeStruct((padded_n, out_f), jnp.float32),
        grid=grid,
        in_specs=[
            pl.BlockSpec((tile_n, in_f), lambda i: (i, 0)),       # x
            pl.BlockSpec((in_f + 1, out_f), lambda i: (0, 0)),    # packed params
            pl.BlockSpec((tile_n, out_f), lambda i: (i, 0)),      # other
        ],
        out_specs=pl.BlockSpec((tile_n, out_f), lambda i: (i, 0)),
        compiler_params=pltpu.CompilerParams(
            dimension_semantics=("parallel",)),
        cost_estimate=pl.CostEstimate(
            flops=2 * N * in_f * out_f,
            transcendentals=0,
            bytes_accessed=4 * (N * in_f + (in_f + 1) * out_f + 2 * N * out_f)),
    )(x, params, other)

    if padded_n != N:
        out = out[:N]
    return out


if __name__ == "__main__":
    key = jax.random.PRNGKey(0)
    k_in, k_other, k_w, k_b = jax.random.split(key, 4)

    N, IN_F, OUT_F = 3, 16, 8

    x = jax.random.normal(k_in, (N, IN_F), dtype=jnp.float32)
    other = jax.random.normal(k_other, (N, OUT_F), dtype=jnp.float32)

    # Deterministic Linear params (PyTorch default: U(-1/sqrt(in), 1/sqrt(in))),
    # stored in PyTorch convention [out_f, in_f].
    bound = 1.0 / jnp.sqrt(jnp.float32(IN_F))
    weight = jax.random.uniform(k_w, (OUT_F, IN_F), minval=-bound, maxval=bound,
                                dtype=jnp.float32)
    bias = jax.random.uniform(k_b, (OUT_F,), minval=-bound, maxval=bound,
                              dtype=jnp.float32)

    # One-time parameter packing (outside the hot path): [IN_F+1, OUT_F].
    params = jnp.concatenate([weight.T, bias.reshape(1, OUT_F)], axis=0)

    # Pure-JAX reference.
    ref = x @ weight.T + bias + other

    out = linear_add(x, params, other)
    jax.block_until_ready(out)

    assert out.shape == (N, OUT_F)
    assert jnp.allclose(out, ref, atol=1e-5, rtol=1e-5)

    print("KERNEL_OK")
</pallas_src>

<mosaic_0001>
module attributes {stable_mosaic.version = 11 : i64} {
  func.func @linear_add_kernel(%arg0: i32, %arg1: memref<3x16xf32, #tpu.memory_space<vmem>>, %arg2: memref<17x8xf32, #tpu.memory_space<vmem>>, %arg3: memref<3x8xf32, #tpu.memory_space<vmem>>, %arg4: memref<3x8xf32, #tpu.memory_space<vmem>>) attributes {dimension_semantics = [#tpu.dimension_semantics<parallel>], iteration_bounds = array<i64: 1>, scalar_prefetch = 0 : i64, scratch_operands = 0 : i64, tpu.core_type = #tpu.core_type<tc>, window_params = [{transform_indices = @transform_0, window_bounds = array<i64: 3, 16>}, {pipeline_mode = #tpu.pipeline_mode<synchronous>, transform_indices = @transform_1, window_bounds = array<i64: 17, 8>}, {transform_indices = @transform_2, window_bounds = array<i64: 3, 8>}, {transform_indices = @transform_3, window_bounds = array<i64: 3, 8>}]} {
    %c0 = arith.constant 0 : index
    %c0_0 = arith.constant 0 : index
    %0 = vector.load %arg1[%c0, %c0_0] : memref<3x16xf32, #tpu.memory_space<vmem>>, vector<3x16xf32>
    %c0_1 = arith.constant 0 : index
    %c0_2 = arith.constant 0 : index
    %1 = vector.load %arg2[%c0_1, %c0_2] : memref<17x8xf32, #tpu.memory_space<vmem>>, vector<16x8xf32>
    %c16 = arith.constant 16 : index
    %c0_3 = arith.constant 0 : index
    %2 = vector.load %arg2[%c16, %c0_3] : memref<17x8xf32, #tpu.memory_space<vmem>>, vector<1x8xf32>
    %cst = arith.constant dense<0.000000e+00> : vector<3x8xf32>
    %3 = tpu.matmul %0, %1, %cst {dimension_numbers = #tpu.dot_dimension_numbers<[1], [0], [0], [1], [0, 0, 1, 1], [], []>, precision = #tpu.contract_precision<fp32>} : vector<3x16xf32>, vector<16x8xf32>, vector<3x8xf32> -> vector<3x8xf32>
    %4 = vector.broadcast %2 : vector<1x8xf32> to vector<3x8xf32>
    %5 = arith.addf %3, %4 : vector<3x8xf32>
    %c0_4 = arith.constant 0 : index
    %c0_5 = arith.constant 0 : index
    %6 = vector.load %arg3[%c0_4, %c0_5] : memref<3x8xf32, #tpu.memory_space<vmem>>, vector<3x8xf32>
    %7 = arith.addf %5, %6 : vector<3x8xf32>
    %c0_6 = arith.constant 0 : index
    %c0_7 = arith.constant 0 : index
    %8 = vector.load %arg4[%c0_6, %c0_7] : memref<3x8xf32, #tpu.memory_space<vmem>>, vector<3x8xf32>
    tpu.vector_store %arg4[%c0_6, %c0_7], %7 {strides = array<i32>} : memref<3x8xf32, #tpu.memory_space<vmem>>, vector<3x8xf32>,
    return
  }
  func.func @transform_0(%arg0: i32) -> (i32, i32) {
    %c0_i32 = arith.constant 0 : i32
    %c0_i32_0 = arith.constant 0 : i32
    return %arg0, %c0_i32 : i32, i32
  }
  func.func @transform_1(%arg0: i32) -> (i32, i32) {
    %c0_i32 = arith.constant 0 : i32
    %c0_i32_0 = arith.constant 0 : i32
    %c0_i32_1 = arith.constant 0 : i32
    return %c0_i32, %c0_i32_0 : i32, i32
  }
  func.func @transform_2(%arg0: i32) -> (i32, i32) {
    %c0_i32 = arith.constant 0 : i32
    %c0_i32_0 = arith.constant 0 : i32
    return %arg0, %c0_i32 : i32, i32
  }
  func.func @transform_3(%arg0: i32) -> (i32, i32) {
    %c0_i32 = arith.constant 0 : i32
    %c0_i32_0 = arith.constant 0 : i32
    return %arg0, %c0_i32 : i32, i32
  }
}

</mosaic_0001>

<llo_original>
// kernel: tpu_custom_call.1
$region0: #{tpu_custom_call.1}
  #allocation0 [shape = 'u32[]', space=smem, size = 0x4, offset = 0x4, fixed_abs, tag = 'smem constant byte address 0x4 - core index']
  #allocation1 [shape = 'u32[144,128]{1,0:T(1,128)}', space=vmem, size = 0x12000, scoped, tag = 'internal scratch']
  %s0 = inlined_call_operand.vmem [shape: f32[3,16], index: 0, kind: input, shape index: {}]
  %s1 = inlined_call_operand.vmem [shape: f32[17,8], index: 1, kind: input, shape index: {}]
  %s2 = inlined_call_operand.vmem [shape: f32[3,8], index: 2, kind: input, shape index: {}]
  %s3 = inlined_call_operand.hbm [shape: f32[3,8], index: 3, kind: output, shape index: {}]
  %s4 = sld [smem:[#allocation0]]
  $region22: #{tpu_custom_call.1} parent=0
    _
  %s6 = ssub.s32 1, %s4
  %s7 = scalar_select 0, %s6, %s4
  $region1: #{tpu_custom_call.1} parent=0
    #allocation2 [shape = 'u8[2048]{0}', space=vmem, size = 0x800, scoped, tag = 'output window, operand 0, single buffered']
    #allocation3 [shape = 's32[1]{0}', space=sflag, size = 0x4, scoped, tag = 'scoped memory for tpu_custom_call.1']
    %8 = vsyncpa [#allocation3], 0
    // Predicated region
    $region2: #{tpu_custom_call.1} parent=1 // pred_check
      _
    $region3: #{tpu_custom_call.1} parent=1 // pred_check_branch
      %10 = sbr.rel (0) target = $region5
    $region4: #{tpu_custom_call.1} parent=1 // pred_region
      _
    $region5: #{tpu_custom_call.1} parent=1 // pred_fallthru
      _
    // Predicated region
    $region6: #{tpu_custom_call.1} parent=1 // pred_check
      _
    $region7: #{tpu_custom_call.1} parent=1 // pred_check_branch
      %12 = sbr.rel (0) target = $region9
    $region8: #{tpu_custom_call.1} parent=1 // pred_region
      _
    $region9: #{tpu_custom_call.1} parent=1 // pred_fallthru
      _
    // Predicated region
    $region10: #{tpu_custom_call.1} parent=1 // pred_check
      _
    $region11: #{tpu_custom_call.1} parent=1 // pred_check_branch
      %14 = sbr.rel (0) target = $region13
    $region12: #{tpu_custom_call.1} parent=1 // pred_region
      _
    $region13: #{tpu_custom_call.1} parent=1 // pred_fallthru
      _
    %v15 = vld [vmem:[%s0] sm:$0x7]
    %v16 = vld [vmem:[%s1] sm:$0xff]
    %v17 = vld [vmem:[%s1 + $0x8] sm:$0xff]
    %v18 = vld [vmem:[%s1 + $0x10] sm:$0x1]
    %v19 = vlaneseq
    %v20 = vshrl.u32 %v19, 7
    %v21 = vsub.s32 0, %v20
    %v22 = vrot.slane %v18, %v21
    %vm23 = vcmask 130048
    %v25 = vsel %vm23, %v15, 0
    %27 = vmatprep.subr.mxu0 0.0
    %v28 = vand.u32 %v16, 4294901760
    %29 = vmatpush1.msra.mxu0 %v28
    %30 = vmatprep.subr.mxu0 0.0
    %v31 = vand.u32 %v17, 4294901760
    %32 = vmatpush1.msra.mxu0 %v31
    %33 = vmatprep.subr.mxu0 0.0
    %34 = vmatpush1.msra.mxu0 0.0
    %35 = vmatprep.subr.mxu0 0.0
    %36 = vmatpush1.msra.mxu0 0.0
    %37 = vmatprep.subr.mxu0 0.0
    %38 = vmatpush1.msra.mxu0 0.0
    %39 = vmatprep.subr.mxu0 0.0
    %40 = vmatpush1.msra.mxu0 0.0
    %41 = vmatprep.subr.mxu0 0.0
    %42 = vmatpush1.msra.mxu0 0.0
    %43 = vmatprep.subr.mxu0 0.0
    %44 = vmatpush1.msra.mxu0 0.0
    %45 = vmatprep.subr.mxu0 0.0
    %46 = vmatpush1.msra.mxu0 0.0
    %47 = vmatprep.subr.mxu0 0.0
    %48 = vmatpush1.msra.mxu0 0.0
    %49 = vmatprep.subr.mxu0 0.0
    %50 = vmatpush1.msra.mxu0 0.0
    %51 = vmatprep.subr.mxu0 0.0
    %52 = vmatpush1.msra.mxu0 0.0
    %53 = vmatprep.subr.mxu0 0.0
    %54 = vmatpush1.msra.mxu0 0.0
    %55 = vmatprep.subr.mxu0 0.0
    %56 = vmatpush1.msra.mxu0 0.0
    %57 = vmatprep.subr.mxu0 0.0
    %58 = vmatpush1.msra.mxu0 0.0
    %59 = vmatprep.subr.mxu0 0.0
    %60 = vmatpush1.msra.mxu0 0.0
    %61 = vmatprep.subr.mxu0 0.0
    %62 = vmatpush1.msra.mxu0 0.0
    %63 = vmatprep.subr.mxu0 0.0
    %64 = vmatpush1.msra.mxu0 0.0
    %65 = vmatprep.subr.mxu0 0.0
    %66 = vmatpush1.msra.mxu0 0.0
    %67 = vmatprep.subr.mxu0 0.0
    %68 = vmatpush1.msra.mxu0 0.0
    %69 = vmatprep.subr.mxu0 0.0
    %70 = vmatpush1.msra.mxu0 0.0
    %71 = vmatprep.subr.mxu0 0.0
    %72 = vmatpush1.msra.mxu0 0.0
    %73 = vmatprep.subr.mxu0 0.0
    %74 = vmatpush1.msra.mxu0 0.0
    %75 = vmatprep.subr.mxu0 0.0
    %76 = vmatpush1.msra.mxu0 0.0
    %77 = vmatprep.subr.mxu0 0.0
    %78 = vmatpush1.msra.mxu0 0.0
    %79 = vmatprep.subr.mxu0 0.0
    %80 = vmatpush1.msra.mxu0 0.0
    %81 = vmatprep.subr.mxu0 0.0
    %82 = vmatpush1.msra.mxu0 0.0
    %83 = vmatprep.subr.mxu0 0.0
    %84 = vmatpush1.msra.mxu0 0.0
    %85 = vmatprep.subr.mxu0 0.0
    %86 = vmatpush1.msra.mxu0 0.0
    %87 = vmatprep.subr.mxu0 0.0
    %88 = vmatpush1.msra.mxu0 0.0
    %89 = vmatprep.subr.mxu0 0.0
    %90 = vmatpush1.msra.mxu0 0.0
    %91 = vmatprep.subr.mxu0 0.0
    %92 = vmatpush1.msra.mxu0 0.0
    %93 = vmatprep.mubr.f32.mxu0 0.0
    %v94 = vand.u32 %v25, 4294901760
    %v95 = vsub.f32 %v25, %v94
    %v96 = vand.u32 %v95, 4294901760
    %v97 = vsub.f32 %v95, %v96
    %v98 = vand.u32 %v97, 4294901760
    %99 = vmatmul.mubr.f32.gmra.mrb[0].mxu0 %v98
    %v100 = vpop.f32.mrb[0].mxu0
    %v101 = vadd.f32 %v22, %v100
    %v102 = vpop.f32.mrb[0].mxu0
    %103 = vdwg.mxu0
    %104 = vmatprep.subr.mxu0 0.0
    %v105 = vand.u32 %v16, 4294901760
    %v106 = vsub.f32 %v16, %v105
    %v107 = vand.u32 %v106, 4294901760
    %v108 = vsub.f32 %v106, %v107
    %v109 = vand.u32 %v108, 4294901760
    %110 = vmatpush1.msra.mxu0 %v109
    %111 = vmatprep.subr.mxu0 0.0
    %v112 = vand.u32 %v17, 4294901760
    %v113 = vsub.f32 %v17, %v112
    %v114 = vand.u32 %v113, 4294901760
    %v115 = vsub.f32 %v113, %v114
    %v116 = vand.u32 %v115, 4294901760
    %117 = vmatpush1.msra.mxu0 %v116
    %118 = vmatprep.subr.mxu0 0.0
    %119 = vmatpush1.msra.mxu0 0.0
    %120 = vmatprep.subr.mxu0 0.0
    %121 = vmatpush1.msra.mxu0 0.0
    %122 = vmatprep.subr.mxu0 0.0
    %123 = vmatpush1.msra.mxu0 0.0
    %124 = vmatprep.subr.mxu0 0.0
    %125 = vmatpush1.msra.mxu0 0.0
    %126 = vmatprep.subr.mxu0 0.0
    %127 = vmatpush1.msra.mxu0 0.0
    %128 = vmatprep.subr.mxu0 0.0
    %129 = vmatpush1.msra.mxu0 0.0
    %130 = vmatprep.subr.mxu0 0.0
    %131 = vmatpush1.msra.mxu0 0.0
    %132 = vmatprep.subr.mxu0 0.0
    %133 = vmatpush1.msra.mxu0 0.0
    %134 = vmatprep.subr.mxu0 0.0
    %135 = vmatpush1.msra.mxu0 0.0
    %136 = vmatprep.subr.mxu0 0.0
    %137 = vmatpush1.msra.mxu0 0.0
    %138 = vmatprep.subr.mxu0 0.0
    %139 = vmatpush1.msra.mxu0 0.0
    %140 = vmatprep.subr.mxu0 0.0
    %141 = vmatpush1.msra.mxu0 0.0
    %142 = vmatprep.subr.mxu0 0.0
    %143 = vmatpush1.msra.mxu0 0.0
    %144 = vmatprep.subr.mxu0 0.0
    %145 = vmatpush1.msra.mxu0 0.0
    %146 = vmatprep.subr.mxu0 0.0
    %147 = vmatpush1.msra.mxu0 0.0
    %148 = vmatprep.subr.mxu0 0.0
    %149 = vmatpush1.msra.mxu0 0.0
    %150 = vmatprep.subr.mxu0 0.0
    %151 = vmatpush1.msra.mxu0 0.0
    %152 = vmatprep.subr.mxu0 0.0
    %153 = vmatpush1.msra.mxu0 0.0
    %154 = vmatprep.subr.mxu0 0.0
    %155 = vmatpush1.msra.mxu0 0.0
    %156 = vmatprep.subr.mxu0 0.0
    %157 = vmatpush1.msra.mxu0 0.0
    %158 = vmatprep.subr.mxu0 0.0
    %159 = vmatpush1.msra.mxu0 0.0
    %160 = vmatprep.subr.mxu0 0.0
    %161 = vmatpush1.msra.mxu0 0.0
    %162 = vmatprep.subr.mxu0 0.0
    %163 = vmatpush1.msra.mxu0 0.0
    %164 = vmatprep.subr.mxu0 0.0
    %165 = vmatpush1.msra.mxu0 0.0
    %166 = vmatprep.subr.mxu0 0.0
    %167 = vmatpush1.msra.mxu0 0.0
    %168 = vmatprep.subr.mxu0 0.0
    %169 = vmatpush1.msra.mxu0 0.0
    %170 = vmatprep.subr.mxu0 0.0
    %171 = vmatpush1.msra.mxu0 0.0
    %172 = vmatprep.subr.mxu0 0.0
    %173 = vmatpush1.msra.mxu0 0.0
    %174 = vmatprep.subr.mxu0 0.0
    %175 = vmatpush1.msra.mxu0 0.0
    %176 = vmatprep.subr.mxu0 0.0
    %177 = vmatpush1.msra.mxu0 0.0
    %178 = vmatprep.mubr.f32.mxu0 0.0
    %v179 = vand.u32 %v25, 4294901760
    %180 = vmatmul.mubr.f32.gmra.mrb[0].mxu0 %v179
    %v181 = vpop.f32.mrb[0].mxu0
    %v182 = vadd.f32 %v101, %v181
    %v183 = vpop.f32.mrb[0].mxu0
    %184 = vdwg.mxu0
    %185 = vmatprep.subr.mxu0 0.0
    %v186 = vand.u32 %v16, 4294901760
    %v187 = vsub.f32 %v16, %v186
    %188 = vmatpush1.msra.mxu0 %v187
    %189 = vmatprep.subr.mxu0 0.0
    %v190 = vand.u32 %v17, 4294901760
    %v191 = vsub.f32 %v17, %v190
    %192 = vmatpush1.msra.mxu0 %v191
    %193 = vmatprep.subr.mxu0 0.0
    %194 = vmatpush1.msra.mxu0 0.0
    %195 = vmatprep.subr.mxu0 0.0
    %196 = vmatpush1.msra.mxu0 0.0
    %197 = vmatprep.subr.mxu0 0.0
    %198 = vmatpush1.msra.mxu0 0.0
    %199 = vmatprep.subr.mxu0 0.0
    %200 = vmatpush1.msra.mxu0 0.0
    %201 = vmatprep.subr.mxu0 0.0
    %202 = vmatpush1.msra.mxu0 0.0
    %203 = vmatprep.subr.mxu0 0.0
    %204 = vmatpush1.msra.mxu0 0.0
    %205 = vmatprep.subr.mxu0 0.0
    %206 = vmatpush1.msra.mxu0 0.0
    %207 = vmatprep.subr.mxu0 0.0
    %208 = vmatpush1.msra.mxu0 0.0
    %209 = vmatprep.subr.mxu0 0.0
    %210 = vmatpush1.msra.mxu0 0.0
    %211 = vmatprep.subr.mxu0 0.0
    %212 = vmatpush1.msra.mxu0 0.0
    %213 = vmatprep.subr.mxu0 0.0
    %214 = vmatpush1.msra.mxu0 0.0
    %215 = vmatprep.subr.mxu0 0.0
    %216 = vmatpush1.msra.mxu0 0.0
    %217 = vmatprep.subr.mxu0 0.0
    %218 = vmatpush1.msra.mxu0 0.0
    %219 = vmatprep.subr.mxu0 0.0
    %220 = vmatpush1.msra.mxu0 0.0
    %221 = vmatprep.subr.mxu0 0.0
    %222 = vmatpush1.msra.mxu0 0.0
    %223 = vmatprep.subr.mxu0 0.0
    %224 = vmatpush1.msra.mxu0 0.0
    %225 = vmatprep.subr.mxu0 0.0
    %226 = vmatpush1.msra.mxu0 0.0
    %227 = vmatprep.subr.mxu0 0.0
    %228 = vmatpush1.msra.mxu0 0.0
    %229 = vmatprep.subr.mxu0 0.0
    %230 = vmatpush1.msra.mxu0 0.0
    %231 = vmatprep.subr.mxu0 0.0
    %232 = vmatpush1.msra.mxu0 0.0
    %233 = vmatprep.subr.mxu0 0.0
    %234 = vmatpush1.msra.mxu0 0.0
    %235 = vmatprep.subr.mxu0 0.0
    %236 = vmatpush1.msra.mxu0 0.0
    %237 = vmatprep.subr.mxu0 0.0
    %238 = vmatpush1.msra.mxu0 0.0
    %239 = vmatprep.subr.mxu0 0.0
    %240 = vmatpush1.msra.mxu0 0.0
    %241 = vmatprep.subr.mxu0 0.0
    %242 = vmatpush1.msra.mxu0 0.0
    %243 = vmatprep.subr.mxu0 0.0
    %244 = vmatpush1.msra.mxu0 0.0
    %245 = vmatprep.subr.mxu0 0.0
    %246 = vmatpush1.msra.mxu0 0.0
    %247 = vmatprep.subr.mxu0 0.0
    %248 = vmatpush1.msra.mxu0 0.0
    %249 = vmatprep.subr.mxu0 0.0
    %250 = vmatpush1.msra.mxu0 0.0
    %251 = vmatprep.subr.mxu0 0.0
    %252 = vmatpush1.msra.mxu0 0.0
    %253 = vmatprep.mubr.f32.mxu0 0.0
    %v254 = vand.u32 %v25, 4294901760
    %v255 = vsub.f32 %v25, %v254
    %256 = vmatmul.mubr.f32.gmra.mrb[0].mxu0 %v255
    %v257 = vpop.f32.mrb[0].mxu0
    %v258 = vadd.f32 %v182, %v257
    %v259 = vpop.f32.mrb[0].mxu0
    %260 = vdwg.mxu0
    %261 = vmatprep.subr.mxu0 0.0
    %v262 = vand.u32 %v16, 4294901760
    %263 = vmatpush1.msra.mxu0 %v262
    %264 = vmatprep.subr.mxu0 0.0
    %v265 = vand.u32 %v17, 4294901760
    %266 = vmatpush1.msra.mxu0 %v265
    %267 = vmatprep.subr.mxu0 0.0
    %268 = vmatpush1.msra.mxu0 0.0
    %269 = vmatprep.subr.mxu0 0.0
    %270 = vmatpush1.msra.mxu0 0.0
    %271 = vmatprep.subr.mxu0 0.0
    %272 = vmatpush1.msra.mxu0 0.0
    %273 = vmatprep.subr.mxu0 0.0
    %274 = vmatpush1.msra.mxu0 0.0
    %275 = vmatprep.subr.mxu0 0.0
    %276 = vmatpush1.msra.mxu0 0.0
    %277 = vmatprep.subr.mxu0 0.0
    %278 = vmatpush1.msra.mxu0 0.0
    %279 = vmatprep.subr.mxu0 0.0
    %280 = vmatpush1.msra.mxu0 0.0
    %281 = vmatprep.subr.mxu0 0.0
    %282 = vmatpush1.msra.mxu0 0.0
    %283 = vmatprep.subr.mxu0 0.0
    %284 = vmatpush1.msra.mxu0 0.0
    %285 = vmatprep.subr.mxu0 0.0
    %286 = vmatpush1.msra.mxu0 0.0
    %287 = vmatprep.subr.mxu0 0.0
    %288 = vmatpush1.msra.mxu0 0.0
    %289 = vmatprep.subr.mxu0 0.0
    %290 = vmatpush1.msra.mxu0 0.0
    %291 = vmatprep.subr.mxu0 0.0
    %292 = vmatpush1.msra.mxu0 0.0
    %293 = vmatprep.subr.mxu0 0.0
    %294 = vmatpush1.msra.mxu0 0.0
    %295 = vmatprep.subr.mxu0 0.0
    %296 = vmatpush1.msra.mxu0 0.0
    %297 = vmatprep.subr.mxu0 0.0
    %298 = vmatpush1.msra.mxu0 0.0
    %299 = vmatprep.subr.mxu0 0.0
    %300 = vmatpush1.msra.mxu0 0.0
    %301 = vmatprep.subr.mxu0 0.0
    %302 = vmatpush1.msra.mxu0 0.0
    %303 = vmatprep.subr.mxu0 0.0
    %304 = vmatpush1.msra.mxu0 0.0
    %305 = vmatprep.subr.mxu0 0.0
    %306 = vmatpush1.msra.mxu0 0.0
    %307 = vmatprep.subr.mxu0 0.0
    %308 = vmatpush1.msra.mxu0 0.0
    %309 = vmatprep.subr.mxu0 0.0
    %310 = vmatpush1.msra.mxu0 0.0
    %311 = vmatprep.subr.mxu0 0.0
    %312 = vmatpush1.msra.mxu0 0.0
    %313 = vmatprep.subr.mxu0 0.0
    %314 = vmatpush1.msra.mxu0 0.0
    %315 = vmatprep.subr.mxu0 0.0
    %316 = vmatpush1.msra.mxu0 0.0
    %317 = vmatprep.subr.mxu0 0.0
    %318 = vmatpush1.msra.mxu0 0.0
    %319 = vmatprep.subr.mxu0 0.0
    %320 = vmatpush1.msra.mxu0 0.0
    %321 = vmatprep.subr.mxu0 0.0
    %322 = vmatpush1.msra.mxu0 0.0
    %323 = vmatprep.subr.mxu0 0.0
    %324 = vmatpush1.msra.mxu0 0.0
    %325 = vmatprep.subr.mxu0 0.0
    %326 = vmatpush1.msra.mxu0 0.0
    %327 = vmatprep.mubr.f32.mxu0 0.0
    %v328 = vand.u32 %v25, 4294901760
    %v329 = vsub.f32 %v25, %v328
    %v330 = vand.u32 %v329, 4294901760
    %331 = vmatmul.mubr.f32.gmra.mrb[0].mxu0 %v330
    %v332 = vpop.f32.mrb[0].mxu0
    %v333 = vadd.f32 %v258, %v332
    %v334 = vpop.f32.mrb[0].mxu0
    %335 = vdwg.mxu0
    %336 = vmatprep.subr.mxu0 0.0
    %v337 = vand.u32 %v16, 4294901760
    %v338 = vsub.f32 %v16, %v337
    %v339 = vand.u32 %v338, 4294901760
    %340 = vmatpush1.msra.mxu0 %v339
    %341 = vmatprep.subr.mxu0 0.0
    %v342 = vand.u32 %v17, 4294901760
    %v343 = vsub.f32 %v17, %v342
    %v344 = vand.u32 %v343, 4294901760
    %345 = vmatpush1.msra.mxu0 %v344
    %346 = vmatprep.subr.mxu0 0.0
    %347 = vmatpush1.msra.mxu0 0.0
    %348 = vmatprep.subr.mxu0 0.0
    %349 = vmatpush1.msra.mxu0 0.0
    %350 = vmatprep.subr.mxu0 0.0
    %351 = vmatpush1.msra.mxu0 0.0
    %352 = vmatprep.subr.mxu0 0.0
    %353 = vmatpush1.msra.mxu0 0.0
    %354 = vmatprep.subr.mxu0 0.0
    %355 = vmatpush1.msra.mxu0 0.0
    %356 = vmatprep.subr.mxu0 0.0
    %357 = vmatpush1.msra.mxu0 0.0
    %358 = vmatprep.subr.mxu0 0.0
    %359 = vmatpush1.msra.mxu0 0.0
    %360 = vmatprep.subr.mxu0 0.0
    %361 = vmatpush1.msra.mxu0 0.0
    %362 = vmatprep.subr.mxu0 0.0
    %363 = vmatpush1.msra.mxu0 0.0
    %364 = vmatprep.subr.mxu0 0.0
    %365 = vmatpush1.msra.mxu0 0.0
    %366 = vmatprep.subr.mxu0 0.0
    %367 = vmatpush1.msra.mxu0 0.0
    %368 = vmatprep.subr.mxu0 0.0
    %369 = vmatpush1.msra.mxu0 0.0
    %370 = vmatprep.subr.mxu0 0.0
    %371 = vmatpush1.msra.mxu0 0.0
    %372 = vmatprep.subr.mxu0 0.0
    %373 = vmatpush1.msra.mxu0 0.0
    %374 = vmatprep.subr.mxu0 0.0
    %375 = vmatpush1.msra.mxu0 0.0
    %376 = vmatprep.subr.mxu0 0.0
    %377 = vmatpush1.msra.mxu0 0.0
    %378 = vmatprep.subr.mxu0 0.0
    %379 = vmatpush1.msra.mxu0 0.0
    %380 = vmatprep.subr.mxu0 0.0
    %381 = vmatpush1.msra.mxu0 0.0
    %382 = vmatprep.subr.mxu0 0.0
    %383 = vmatpush1.msra.mxu0 0.0
    %384 = vmatprep.subr.mxu0 0.0
    %385 = vmatpush1.msra.mxu0 0.0
    %386 = vmatprep.subr.mxu0 0.0
    %387 = vmatpush1.msra.mxu0 0.0
    %388 = vmatprep.subr.mxu0 0.0
    %389 = vmatpush1.msra.mxu0 0.0
    %390 = vmatprep.subr.mxu0 0.0
    %391 = vmatpush1.msra.mxu0 0.0
    %392 = vmatprep.subr.mxu0 0.0
    %393 = vmatpush1.msra.mxu0 0.0
    %394 = vmatprep.subr.mxu0 0.0
    %395 = vmatpush1.msra.mxu0 0.0
    %396 = vmatprep.subr.mxu0 0.0
    %397 = vmatpush1.msra.mxu0 0.0
    %398 = vmatprep.subr.mxu0 0.0
    %399 = vmatpush1.msra.mxu0 0.0
    %400 = vmatprep.subr.mxu0 0.0
    %401 = vmatpush1.msra.mxu0 0.0
    %402 = vmatprep.subr.mxu0 0.0
    %403 = vmatpush1.msra.mxu0 0.0
    %404 = vmatprep.subr.mxu0 0.0
    %405 = vmatpush1.msra.mxu0 0.0
    %406 = vmatprep.mubr.f32.mxu0 0.0
    %v407 = vand.u32 %v25, 4294901760
    %408 = vmatmul.mubr.f32.gmra.mrb[0].mxu0 %v407
    %v409 = vpop.f32.mrb[0].mxu0
    %v410 = vadd.f32 %v333, %v409
    %v411 = vpop.f32.mrb[0].mxu0
    %412 = vdwg.mxu0
    %413 = vmatprep.subr.mxu0 0.0
    %v414 = vand.u32 %v16, 4294901760
    %415 = vmatpush1.msra.mxu0 %v414
    %416 = vmatprep.subr.mxu0 0.0
    %v417 = vand.u32 %v17, 4294901760
    %418 = vmatpush1.msra.mxu0 %v417
    %419 = vmatprep.subr.mxu0 0.0
    %420 = vmatpush1.msra.mxu0 0.0
    %421 = vmatprep.subr.mxu0 0.0
    %422 = vmatpush1.msra.mxu0 0.0
    %423 = vmatprep.subr.mxu0 0.0
    %424 = vmatpush1.msra.mxu0 0.0
    %425 = vmatprep.subr.mxu0 0.0
    %426 = vmatpush1.msra.mxu0 0.0
    %427 = vmatprep.subr.mxu0 0.0
    %428 = vmatpush1.msra.mxu0 0.0
    %429 = vmatprep.subr.mxu0 0.0
    %430 = vmatpush1.msra.mxu0 0.0
    %431 = vmatprep.subr.mxu0 0.0
    %432 = vmatpush1.msra.mxu0 0.0
    %433 = vmatprep.subr.mxu0 0.0
    %434 = vmatpush1.msra.mxu0 0.0
    %435 = vmatprep.subr.mxu0 0.0
    %436 = vmatpush1.msra.mxu0 0.0
    %437 = vmatprep.subr.mxu0 0.0
    %438 = vmatpush1.msra.mxu0 0.0
    %439 = vmatprep.subr.mxu0 0.0
    %440 = vmatpush1.msra.mxu0 0.0
    %441 = vmatprep.subr.mxu0 0.0
    %442 = vmatpush1.msra.mxu0 0.0
    %443 = vmatprep.subr.mxu0 0.0
    %444 = vmatpush1.msra.mxu0 0.0
    %445 = vmatprep.subr.mxu0 0.0
    %446 = vmatpush1.msra.mxu0 0.0
    %447 = vmatprep.subr.mxu0 0.0
    %448 = vmatpush1.msra.mxu0 0.0
    %449 = vmatprep.subr.mxu0 0.0
    %450 = vmatpush1.msra.mxu0 0.0
    %451 = vmatprep.subr.mxu0 0.0
    %452 = vmatpush1.msra.mxu0 0.0
    %453 = vmatprep.subr.mxu0 0.0
    %454 = vmatpush1.msra.mxu0 0.0
    %455 = vmatprep.subr.mxu0 0.0
    %456 = vmatpush1.msra.mxu0 0.0
    %457 = vmatprep.subr.mxu0 0.0
    %458 = vmatpush1.msra.mxu0 0.0
    %459 = vmatprep.subr.mxu0 0.0
    %460 = vmatpush1.msra.mxu0 0.0
    %461 = vmatprep.subr.mxu0 0.0
    %462 = vmatpush1.msra.mxu0 0.0
    %463 = vmatprep.subr.mxu0 0.0
    %464 = vmatpush1.msra.mxu0 0.0
    %465 = vmatprep.subr.mxu0 0.0
    %466 = vmatpush1.msra.mxu0 0.0
    %467 = vmatprep.subr.mxu0 0.0
    %468 = vmatpush1.msra.mxu0 0.0
    %469 = vmatprep.subr.mxu0 0.0
    %470 = vmatpush1.msra.mxu0 0.0
    %471 = vmatprep.subr.mxu0 0.0
    %472 = vmatpush1.msra.mxu0 0.0
    %473 = vmatprep.subr.mxu0 0.0
    %474 = vmatpush1.msra.mxu0 0.0
    %475 = vmatprep.subr.mxu0 0.0
    %476 = vmatpush1.msra.mxu0 0.0
    %477 = vmatprep.subr.mxu0 0.0
    %478 = vmatpush1.msra.mxu0 0.0
    %479 = vmatprep.mubr.f32.mxu0 0.0
    %v480 = vand.u32 %v25, 4294901760
    %481 = vmatmul.mubr.f32.gmra.mrb[0].mxu0 %v480
    %v482 = vpop.f32.mrb[0].mxu0
    %v483 = vadd.f32 %v410, %v482
    %v484 = vpop.f32.mrb[0].mxu0
    %485 = vdwg.mxu0
    %v486 = vld [vmem:[%s2] sm:$0x7]
    %v487 = vadd.f32 %v483, %v486
    %vm488 = vcmask 59392
    %489 = vst.msk [vmem:[#allocation2] sm:$0x7] %vm488, %v487
    // Predicated region
    $region14: #{tpu_custom_call.1} parent=1 // pred_check
      _
    $region15: #{tpu_custom_call.1} parent=1 // pred_check_branch
      %491 = sbr.rel (0) target = $region17
    $region16: #{tpu_custom_call.1} parent=1 // pred_region
      %s493 = ssub.s32 64, 64
      %494 = vsyncadd [#allocation3], %s493
      %s496 = sshll.u32 [#allocation2], 4
      %s497 = int_to_ptr.vmem [resolvable:$true] %s496
      %499 = dma.vmem_to_hbm [thread:$0]  %s497, 64, %s3, [#allocation3]
    $region17: #{tpu_custom_call.1} parent=1 // pred_fallthru
      _
    // Predicated region
    $region18: #{tpu_custom_call.1} parent=1 // pred_check
      _
    $region19: #{tpu_custom_call.1} parent=1 // pred_check_branch
      %501 = sbr.rel (0) target = $region21
    $region20: #{tpu_custom_call.1} parent=1 // pred_region
      %502 = dma.done [#allocation3], 64
    $region21: #{tpu_custom_call.1} parent=1 // pred_fallthru
      _
    %503 = vsyncpa [#allocation3], 1

</llo_original>
